<compile_context>
chip_gen: v5e
topology: v5e:2x2
jax: 0.10.0
libtpu: 0.0.40
codegen_flags: <defaults>
</compile_context>

<pallas_src>
import functools

import jax
import jax.numpy as jnp
from jax.experimental import pallas as pl
from jax.experimental.pallas import tpu as pltpu

HIDDEN1 = 512
HIDDEN2 = 256
LANE = 128
_TB_MAX = 1024  # max batch rows per grid step (sweepable 512-2048)


def _round_up(n, m):
    return ((n + m - 1) // m) * m


def _choose_tile(b8):
    """Pick the batch tile: big enough to amortize grid-step overhead, but
    at least two grid steps when possible so v7x megacore shards the batch."""
    if b8 <= 8:
        return 8
    if b8 <= _TB_MAX:
        return _round_up(-(-b8 // 2), 8)  # cdiv(b8, 2) rounded up to 8
    return _TB_MAX


def _policy_kernel(x_ref, w1_ref, b1_ref, w2_ref, b2_ref, w3_ref, b3_ref, o_ref):
    # fc1: bf16 operands on the MXU, f32 accumulation; bias + relu in f32
    # (v5e VPU/EUP have no bf16 elementwise path).
    h1 = jnp.dot(x_ref[...], w1_ref[...], preferred_element_type=jnp.float32)
    h1 = jnp.maximum(h1 + b1_ref[...], 0.0)
    # (dropout1: identity in eval mode)

    # fc2
    h2 = jnp.dot(h1.astype(jnp.bfloat16), w2_ref[...],
                 preferred_element_type=jnp.float32)
    h2 = jnp.maximum(h2 + b2_ref[...], 0.0)
    # (dropout2: identity in eval mode)

    # fc3 (output columns pre-padded to a lane-dense 128-wide tile; the padded
    # bias lanes carry -1e30, so the softmax mask is already baked in).
    logits = jnp.dot(h2.astype(jnp.bfloat16), w3_ref[...],
                     preferred_element_type=jnp.float32)
    logits = logits + b3_ref[...]

    # Numerically stable softmax over the last dim (all f32, exact divide).
    m = jnp.max(logits, axis=-1, keepdims=True)
    e = jnp.exp(logits - m)          # padded lanes: exp(-1e30 - m) == 0 exactly
    s = jnp.sum(e, axis=-1, keepdims=True)
    o_ref[...] = (e / s).astype(o_ref.dtype)


def prepare_params(params):
    """One-time weight preparation (hoisted out of the per-call hot path):
    bf16 casts, lane-padding of fc3 to 128 columns with the softmax mask baked
    into the padded bias, and [1, D] bias rows. Returns (prepared, d_out)."""
    w1, b1, w2, b2, w3, b3 = (
        params["w1"], params["b1"], params["w2"],
        params["b2"], params["w3"], params["b3"],
    )
    d_out = w3.shape[1]
    d_out_pad = _round_up(max(d_out, LANE), LANE)

    w3p = jnp.zeros((w3.shape[0], d_out_pad), w3.dtype).at[:, :d_out].set(w3)
    # Padded lanes get a large finite negative bias -> exp() underflows to 0.
    b3p = jnp.full((d_out_pad,), -1e30, jnp.float32).at[:d_out].set(
        b3.astype(jnp.float32))

    prepared = {
        "w1": w1.astype(jnp.bfloat16),
        "b1": b1.reshape(1, -1).astype(jnp.float32),
        "w2": w2.astype(jnp.bfloat16),
        "b2": b2.reshape(1, -1).astype(jnp.float32),
        "w3": w3p.astype(jnp.bfloat16),
        "b3": b3p.reshape(1, -1),
    }
    return prepared, d_out


@functools.partial(jax.jit, static_argnames=("d_out",))
def policy_network_forward(x, prepared, *, d_out):
    """x: [B, input_dim] or [input_dim] float32. Returns probs [B, d_out] f32."""
    if x.ndim == 1:
        x = x[None, :]  # mirrors torch unsqueeze(0) for 1-D inputs
    B, D_in = x.shape
    d_out_pad = prepared["w3"].shape[1]

    # ---- batch tiling: TB rows per grid step, padded batch ----
    B8 = _round_up(B, 8)
    TB = _choose_tile(B8)
    B_pad = _round_up(B8, TB)

    # Cast first, then pad the bf16 array (single pass, only when needed).
    x_bf = x.astype(jnp.bfloat16)
    if B_pad != B:
        x_bf = jax.lax.pad(x_bf, jnp.array(0.0, jnp.bfloat16),
                           ((0, B_pad - B, 0), (0, 0, 0)))

    grid = (B_pad // TB,)

    # Weights/biases: same block every step -> stay resident in VMEM,
    # DMA'd once per call.
    resident = lambda a: pl.BlockSpec(a.shape, lambda i: (0, 0))

    out = pl.pallas_call(
        _policy_kernel,
        out_shape=jax.ShapeDtypeStruct((B_pad, d_out_pad), jnp.float32),
        grid_spec=pltpu.PrefetchScalarGridSpec(
            num_scalar_prefetch=0,
            grid=grid,
            in_specs=[
                pl.BlockSpec((TB, D_in), lambda i: (i, 0)),
                resident(prepared["w1"]), resident(prepared["b1"]),
                resident(prepared["w2"]), resident(prepared["b2"]),
                resident(prepared["w3"]), resident(prepared["b3"]),
            ],
            out_specs=pl.BlockSpec((TB, d_out_pad), lambda i: (i, 0)),
        ),
        compiler_params=pltpu.CompilerParams(
            dimension_semantics=("parallel",),
            vmem_limit_bytes=48 * 1024 * 1024,
        ),
    )(x_bf, prepared["w1"], prepared["b1"], prepared["w2"], prepared["b2"],
      prepared["w3"], prepared["b3"])

    return out[:B, :d_out]


def init_params(input_dim, output_dim, key):
    """Deterministic synthetic parameters with the shapes nn.Linear implies."""
    ks = jax.random.split(key, 6)

    def lin(kw, kb, fan_in, fan_out):
        bound = 1.0 / jnp.sqrt(fan_in)
        w = jax.random.uniform(kw, (fan_in, fan_out), jnp.float32, -bound, bound)
        b = jax.random.uniform(kb, (fan_out,), jnp.float32, -bound, bound)
        return w, b

    w1, b1 = lin(ks[0], ks[1], input_dim, HIDDEN1)
    w2, b2 = lin(ks[2], ks[3], HIDDEN1, HIDDEN2)
    w3, b3 = lin(ks[4], ks[5], HIDDEN2, output_dim)
    return {"w1": w1, "b1": b1, "w2": w2, "b2": b2, "w3": w3, "b3": b3}


def _reference_forward(x, params):
    """Pure-JAX f32 reference (eval-mode dropout = identity)."""
    h1 = jnp.maximum(x @ params["w1"] + params["b1"], 0.0)
    h2 = jnp.maximum(h1 @ params["w2"] + params["b2"], 0.0)
    logits = h2 @ params["w3"] + params["b3"]
    return jax.nn.softmax(logits, axis=-1)


if __name__ == "__main__":
    key = jax.random.PRNGKey(0)
    k_param, k_x1, k_x2 = jax.random.split(key, 3)

    input_dim = 32
    output_dim = 16
    batch = 8

    params = init_params(input_dim, output_dim, k_param)
    prepared, d_out = prepare_params(params)

    # --- small batch (single grid step) ---
    x = jax.random.normal(k_x1, (batch, input_dim), jnp.float32)
    probs = policy_network_forward(x, prepared, d_out=d_out)
    probs = jax.block_until_ready(probs)

    assert probs.shape == (batch, output_dim)
    row_sums = jnp.sum(probs, axis=-1)
    assert jnp.allclose(row_sums, jnp.ones_like(row_sums), atol=1e-3)
    ref = _reference_forward(x, params)
    assert jnp.allclose(probs, ref, atol=2e-2)

    # --- batch that exercises multi-step grid + batch padding ---
    batch2 = 20
    x2 = jax.random.normal(k_x2, (batch2, input_dim), jnp.float32)
    probs2 = jax.block_until_ready(
        policy_network_forward(x2, prepared, d_out=d_out))
    assert probs2.shape == (batch2, output_dim)
    row_sums2 = jnp.sum(probs2, axis=-1)
    assert jnp.allclose(row_sums2, jnp.ones_like(row_sums2), atol=1e-3)
    ref2 = _reference_forward(x2, params)
    assert jnp.allclose(probs2, ref2, atol=2e-2)

    print("KERNEL_OK")
</pallas_src>

<mosaic_0001>
module attributes {stable_mosaic.version = 11 : i64} {
  func.func @_policy_kernel(%arg0: i32, %arg1: memref<8x32xbf16, #tpu.memory_space<vmem>>, %arg2: memref<32x512xbf16, #tpu.memory_space<vmem>>, %arg3: memref<1x512xf32, #tpu.memory_space<vmem>>, %arg4: memref<512x256xbf16, #tpu.memory_space<vmem>>, %arg5: memref<1x256xf32, #tpu.memory_space<vmem>>, %arg6: memref<256x128xbf16, #tpu.memory_space<vmem>>, %arg7: memref<1x128xf32, #tpu.memory_space<vmem>>, %arg8: memref<8x128xf32, #tpu.memory_space<vmem>>) attributes {dimension_semantics = [#tpu.dimension_semantics<parallel>], iteration_bounds = array<i64: 1>, scalar_prefetch = 0 : i64, scratch_operands = 0 : i64, tpu.core_type = #tpu.core_type<tc>, window_params = [{transform_indices = @transform_0, window_bounds = array<i64: 8, 32>}, {pipeline_mode = #tpu.pipeline_mode<synchronous>, transform_indices = @transform_1, window_bounds = array<i64: 32, 512>}, {pipeline_mode = #tpu.pipeline_mode<synchronous>, transform_indices = @transform_2, window_bounds = array<i64: 1, 512>}, {pipeline_mode = #tpu.pipeline_mode<synchronous>, transform_indices = @transform_3, window_bounds = array<i64: 512, 256>}, {pipeline_mode = #tpu.pipeline_mode<synchronous>, transform_indices = @transform_4, window_bounds = array<i64: 1, 256>}, {pipeline_mode = #tpu.pipeline_mode<synchronous>, transform_indices = @transform_5, window_bounds = array<i64: 256, 128>}, {pipeline_mode = #tpu.pipeline_mode<synchronous>, transform_indices = @transform_6, window_bounds = array<i64: 1, 128>}, {transform_indices = @transform_7, window_bounds = array<i64: 8, 128>}]} {
    %c0 = arith.constant 0 : index
    %c0_0 = arith.constant 0 : index
    %0 = vector.load %arg1[%c0, %c0_0] : memref<8x32xbf16, #tpu.memory_space<vmem>>, vector<8x32xbf16>
    %c0_1 = arith.constant 0 : index
    %c0_2 = arith.constant 0 : index
    %1 = vector.load %arg2[%c0_1, %c0_2] : memref<32x512xbf16, #tpu.memory_space<vmem>>, vector<32x512xbf16>
    %cst = arith.constant dense<0.000000e+00> : vector<8x512xf32>
    %2 = tpu.matmul %0, %1, %cst {dimension_numbers = #tpu.dot_dimension_numbers<[1], [0], [0], [1], [0, 0, 1, 1], [], []>} : vector<8x32xbf16>, vector<32x512xbf16>, vector<8x512xf32> -> vector<8x512xf32>
    %c0_3 = arith.constant 0 : index
    %c0_4 = arith.constant 0 : index
    %3 = vector.load %arg3[%c0_3, %c0_4] : memref<1x512xf32, #tpu.memory_space<vmem>>, vector<1x512xf32>
    %4 = vector.broadcast %3 : vector<1x512xf32> to vector<8x512xf32>
    %5 = arith.addf %2, %4 : vector<8x512xf32>
    %cst_5 = arith.constant 0.000000e+00 : f32
    %6 = vector.broadcast %cst_5 : f32 to vector<8x512xf32>
    %7 = arith.maximumf %5, %6 : vector<8x512xf32>
    %8 = arith.truncf %7 : vector<8x512xf32> to vector<8x512xbf16>
    %c0_6 = arith.constant 0 : index
    %c0_7 = arith.constant 0 : index
    %9 = vector.load %arg4[%c0_6, %c0_7] : memref<512x256xbf16, #tpu.memory_space<vmem>>, vector<512x256xbf16>
    %cst_8 = arith.constant dense<0.000000e+00> : vector<8x256xf32>
    %10 = tpu.matmul %8, %9, %cst_8 {dimension_numbers = #tpu.dot_dimension_numbers<[1], [0], [0], [1], [0, 0, 1, 1], [], []>} : vector<8x512xbf16>, vector<512x256xbf16>, vector<8x256xf32> -> vector<8x256xf32>
    %c0_9 = arith.constant 0 : index
    %c0_10 = arith.constant 0 : index
    %11 = vector.load %arg5[%c0_9, %c0_10] : memref<1x256xf32, #tpu.memory_space<vmem>>, vector<1x256xf32>
    %12 = vector.broadcast %11 : vector<1x256xf32> to vector<8x256xf32>
    %13 = arith.addf %10, %12 : vector<8x256xf32>
    %cst_11 = arith.constant 0.000000e+00 : f32
    %14 = vector.broadcast %cst_11 : f32 to vector<8x256xf32>
    %15 = arith.maximumf %13, %14 : vector<8x256xf32>
    %16 = arith.truncf %15 : vector<8x256xf32> to vector<8x256xbf16>
    %c0_12 = arith.constant 0 : index
    %c0_13 = arith.constant 0 : index
    %17 = vector.load %arg6[%c0_12, %c0_13] : memref<256x128xbf16, #tpu.memory_space<vmem>>, vector<256x128xbf16>
    %cst_14 = arith.constant dense<0.000000e+00> : vector<8x128xf32>
    %18 = tpu.matmul %16, %17, %cst_14 {dimension_numbers = #tpu.dot_dimension_numbers<[1], [0], [0], [1], [0, 0, 1, 1], [], []>} : vector<8x256xbf16>, vector<256x128xbf16>, vector<8x128xf32> -> vector<8x128xf32>
    %c0_15 = arith.constant 0 : index
    %c0_16 = arith.constant 0 : index
    %19 = vector.load %arg7[%c0_15, %c0_16] : memref<1x128xf32, #tpu.memory_space<vmem>>, vector<1x128xf32>
    %20 = vector.broadcast %19 : vector<1x128xf32> to vector<8x128xf32>
    %21 = arith.addf %18, %20 : vector<8x128xf32>
    %cst_17 = arith.constant dense<0xFF800000> : vector<8xf32>
    %22 = vector.multi_reduction <maximumf>, %21, %cst_17 [1] : vector<8x128xf32> to vector<8xf32>
    %23 = vector.shape_cast %22 : vector<8xf32> to vector<8x1xf32>
    %24 = vector.broadcast %23 : vector<8x1xf32> to vector<8x128xf32>
    %25 = arith.subf %21, %24 : vector<8x128xf32>
    %26 = math.exp %25 : vector<8x128xf32>
    %cst_18 = arith.constant dense<0.000000e+00> : vector<8xf32>
    %27 = vector.multi_reduction <add>, %26, %cst_18 [1] : vector<8x128xf32> to vector<8xf32>
    %28 = vector.shape_cast %27 : vector<8xf32> to vector<8x1xf32>
    %29 = vector.broadcast %28 : vector<8x1xf32> to vector<8x128xf32>
    %30 = arith.divf %26, %29 : vector<8x128xf32>
    %c0_19 = arith.constant 0 : index
    %c0_20 = arith.constant 0 : index
    %31 = vector.load %arg8[%c0_19, %c0_20] : memref<8x128xf32, #tpu.memory_space<vmem>>, vector<8x128xf32>
    tpu.vector_store %arg8[%c0_19, %c0_20], %30 {strides = array<i32>} : memref<8x128xf32, #tpu.memory_space<vmem>>, vector<8x128xf32>,
    return
  }
  func.func @transform_0(%arg0: i32) -> (i32, i32) {
    %c0_i32 = arith.constant 0 : i32
    %c0_i32_0 = arith.constant 0 : i32
    return %arg0, %c0_i32 : i32, i32
  }
  func.func @transform_1(%arg0: i32) -> (i32, i32) {
    %c0_i32 = arith.constant 0 : i32
    %c0_i32_0 = arith.constant 0 : i32
    %c0_i32_1 = arith.constant 0 : i32
    return %c0_i32, %c0_i32_0 : i32, i32
  }
  func.func @transform_2(%arg0: i32) -> (i32, i32) {
    %c0_i32 = arith.constant 0 : i32
    %c0_i32_0 = arith.constant 0 : i32
    %c0_i32_1 = arith.constant 0 : i32
    return %c0_i32, %c0_i32_0 : i32, i32
  }
  func.func @transform_3(%arg0: i32) -> (i32, i32) {
    %c0_i32 = arith.constant 0 : i32
    %c0_i32_0 = arith.constant 0 : i32
    %c0_i32_1 = arith.constant 0 : i32
    return %c0_i32, %c0_i32_0 : i32, i32
  }
  func.func @transform_4(%arg0: i32) -> (i32, i32) {
    %c0_i32 = arith.constant 0 : i32
    %c0_i32_0 = arith.constant 0 : i32
    %c0_i32_1 = arith.constant 0 : i32
    return %c0_i32, %c0_i32_0 : i32, i32
  }
  func.func @transform_5(%arg0: i32) -> (i32, i32) {
    %c0_i32 = arith.constant 0 : i32
    %c0_i32_0 = arith.constant 0 : i32
    %c0_i32_1 = arith.constant 0 : i32
    return %c0_i32, %c0_i32_0 : i32, i32
  }
  func.func @transform_6(%arg0: i32) -> (i32, i32) {
    %c0_i32 = arith.constant 0 : i32
    %c0_i32_0 = arith.constant 0 : i32
    %c0_i32_1 = arith.constant 0 : i32
    return %c0_i32, %c0_i32_0 : i32, i32
  }
  func.func @transform_7(%arg0: i32) -> (i32, i32) {
    %c0_i32 = arith.constant 0 : i32
    %c0_i32_0 = arith.constant 0 : i32
    return %arg0, %c0_i32 : i32, i32
  }
}

</mosaic_0001>

<llo_original>
// kernel: policy_network_forward.1
$region0: #{policy_network_forward.1}
  #allocation0 [shape = 'u32[]', space=smem, size = 0x4, offset = 0x4, fixed_abs, tag = 'smem constant byte address 0x4 - core index']
  #allocation1 [shape = 'u32[72,128]{1,0:T(1,128)}', space=vmem, size = 0x9000, scoped, tag = 'internal scratch']
  %s0 = inlined_call_operand.vmem [shape: bf16[8,32], index: 0, kind: input, shape index: {}]
  %s1 = inlined_call_operand.hbm [shape: bf16[32,512], index: 1, kind: input, shape index: {}]
  %s2 = inlined_call_operand.vmem [shape: f32[1,512], index: 2, kind: input, shape index: {}]
  %s3 = inlined_call_operand.hbm [shape: bf16[512,256], index: 3, kind: input, shape index: {}]
  %s4 = inlined_call_operand.vmem [shape: f32[1,256], index: 4, kind: input, shape index: {}]
  %s5 = inlined_call_operand.hbm [shape: bf16[256,128], index: 5, kind: input, shape index: {}]
  %s6 = inlined_call_operand.vmem [shape: f32[1,128], index: 6, kind: input, shape index: {}]
  %s7 = inlined_call_operand.hbm [shape: f32[8,128], index: 7, kind: output, shape index: {}]
  %s8 = sld [smem:[#allocation0]]
  $region50: #{policy_network_forward.1} parent=0
    _
  %s10 = ssub.s32 1, %s8
  %s11 = scalar_select 0, %s10, %s8
  $region1: #{policy_network_forward.1} parent=0
    #allocation2 [shape = 'u8[32768]{0}', space=vmem, size = 0x8000, scoped, tag = 'input window, operand 1, single buffered']
    #allocation3 [shape = 's32[1]{0}', space=sflag, size = 0x4, scoped, tag = 'scoped memory for policy_network_forward.1']
    #allocation4 [shape = 's32[1]{0}', space=sflag, size = 0x4, scoped, tag = 'scoped memory for policy_network_forward.1']
    #allocation5 [shape = 'u8[262144]{0}', space=vmem, size = 0x40000, scoped, tag = 'input window, operand 3, single buffered']
    #allocation6 [shape = 's32[1]{0}', space=sflag, size = 0x4, scoped, tag = 'scoped memory for policy_network_forward.1']
    #allocation7 [shape = 'u8[65536]{0}', space=vmem, size = 0x10000, scoped, tag = 'input window, operand 5, single buffered']
    #allocation8 [shape = 'u8[4096]{0}', space=vmem, size = 0x1000, scoped, tag = 'output window, operand 0, single buffered']
    %12 = vsyncpa [#allocation3], 0
    %13 = vsyncpa [#allocation6], 0
    %14 = vsyncpa [#allocation4], 0
    // Predicated region
    $region2: #{policy_network_forward.1} parent=1 // pred_check
      _
    $region3: #{policy_network_forward.1} parent=1 // pred_check_branch
      %16 = sbr.rel (0) target = $region5
    $region4: #{policy_network_forward.1} parent=1 // pred_region
      _
    $region5: #{policy_network_forward.1} parent=1 // pred_fallthru
      _
    // Predicated region
    $region6: #{policy_network_forward.1} parent=1 // pred_check
      _
    $region7: #{policy_network_forward.1} parent=1 // pred_check_branch
      %18 = sbr.rel (0) target = $region9
    $region8: #{policy_network_forward.1} parent=1 // pred_region
      %20 = vsyncadd [#allocation3], 0
      %s21 = sshll.u32 %s1, 4
      %s22 = int_to_ptr.hbm [resolvable:$true] %s21
      %s23 = sshll.u32 [#allocation2], 4
      %s24 = int_to_ptr.vmem [resolvable:$true] %s23
      %29 = dma.hbm_to_vmem [thread:$0]  %s22, 1024, %s24, [#allocation3], 256, 256, 16
    $region9: #{policy_network_forward.1} parent=1 // pred_fallthru
      _
    // Predicated region
    $region10: #{policy_network_forward.1} parent=1 // pred_check
      _
    $region11: #{policy_network_forward.1} parent=1 // pred_check_branch
      %31 = sbr.rel (0) target = $region13
    $region12: #{policy_network_forward.1} parent=1 // pred_region
      _
    $region13: #{policy_network_forward.1} parent=1 // pred_fallthru
      _
    // Predicated region
    $region14: #{policy_network_forward.1} parent=1 // pred_check
      _
    $region15: #{policy_network_forward.1} parent=1 // pred_check_branch
      %33 = sbr.rel (0) target = $region17
    $region16: #{policy_network_forward.1} parent=1 // pred_region
      %35 = vsyncadd [#allocation6], 0
      %s36 = sshll.u32 %s3, 4
      %s37 = int_to_ptr.hbm [resolvable:$true] %s36
      %s38 = sshll.u32 [#allocation5], 4
      %s39 = int_to_ptr.vmem [resolvable:$true] %s38
      %44 = dma.hbm_to_vmem [thread:$0]  %s37, 8192, %s39, [#allocation6], 128, 128, 8
    $region17: #{policy_network_forward.1} parent=1 // pred_fallthru
      _
    // Predicated region
    $region18: #{policy_network_forward.1} parent=1 // pred_check
      _
    $region19: #{policy_network_forward.1} parent=1 // pred_check_branch
      %46 = sbr.rel (0) target = $region21
    $region20: #{policy_network_forward.1} parent=1 // pred_region
      _
    $region21: #{policy_network_forward.1} parent=1 // pred_fallthru
      _
    // Predicated region
    $region22: #{policy_network_forward.1} parent=1 // pred_check
      _
    $region23: #{policy_network_forward.1} parent=1 // pred_check_branch
      %48 = sbr.rel (0) target = $region25
    $region24: #{policy_network_forward.1} parent=1 // pred_region
      %50 = vsyncadd [#allocation6], 0
      %s51 = sshll.u32 %s5, 4
      %s52 = int_to_ptr.hbm [resolvable:$true] %s51
      %s53 = sshll.u32 [#allocation7], 4
      %s54 = int_to_ptr.vmem [resolvable:$true] %s53
      %59 = dma.hbm_to_vmem [thread:$0]  %s52, 2048, %s54, [#allocation6], 64, 64, 4
    $region25: #{policy_network_forward.1} parent=1 // pred_fallthru
      _
    // Predicated region
    $region26: #{policy_network_forward.1} parent=1 // pred_check
      _
    $region27: #{policy_network_forward.1} parent=1 // pred_check_branch
      %61 = sbr.rel (0) target = $region29
    $region28: #{policy_network_forward.1} parent=1 // pred_region
      _
    $region29: #{policy_network_forward.1} parent=1 // pred_fallthru
      _
    // Predicated region
    $region30: #{policy_network_forward.1} parent=1 // pred_check
      _
    $region31: #{policy_network_forward.1} parent=1 // pred_check_branch
      %63 = sbr.rel (0) target = $region33
    $region32: #{policy_network_forward.1} parent=1 // pred_region
      %65 = dma.done [#allocation3], 1024
    $region33: #{policy_network_forward.1} parent=1 // pred_fallthru
      _
    // Predicated region
    $region34: #{policy_network_forward.1} parent=1 // pred_check
      _
    $region35: #{policy_network_forward.1} parent=1 // pred_check_branch
      %67 = sbr.rel (0) target = $region37
    $region36: #{policy_network_forward.1} parent=1 // pred_region
      %69 = dma.done [#allocation6], 8192
    $region37: #{policy_network_forward.1} parent=1 // pred_fallthru
      _
    // Predicated region
    $region38: #{policy_network_forward.1} parent=1 // pred_check
      _
    $region39: #{policy_network_forward.1} parent=1 // pred_check_branch
      %71 = sbr.rel (0) target = $region41
    $region40: #{policy_network_forward.1} parent=1 // pred_region
      %73 = dma.done [#allocation6], 2048
    $region41: #{policy_network_forward.1} parent=1 // pred_fallthru
      _
    %v75 = vld [vmem:[%s0] sm:$0xf]
    %v76 = vld [vmem:[#allocation2] sm:$0xff]
    %v77 = vld [vmem:[#allocation2 + $0x8] sm:$0xff]
    %v78 = vld [vmem:[#allocation2 + $0x10] sm:$0xff]
    %v79 = vld [vmem:[#allocation2 + $0x18] sm:$0xff]
    %v80 = vld [vmem:[#allocation2 + $0x20] sm:$0xff]
    %v81 = vld [vmem:[#allocation2 + $0x28] sm:$0xff]
    %v82 = vld [vmem:[#allocation2 + $0x30] sm:$0xff]
    %v83 = vld [vmem:[#allocation2 + $0x38] sm:$0xff]
    %v84 = vld [vmem:[%s2] sm:$0xf]
    %v86 = vperm.slane %v84, 0
    %v87 = vperm.slane %v84, 1
    %v88 = vperm.slane %v84, 2
    %v89 = vperm.slane %v84, 3
    %v102 = vunpack.c.l.b16 %v76
    %v103 = vunpack.c.h.b16 %v76
    %v104 = vunpack.c.l.b16 %v77
    %v105 = vunpack.c.h.b16 %v77
    %v106 = vunpack.c.l.b16 %v78
    %v107 = vunpack.c.h.b16 %v78
    %v108 = vunpack.c.l.b16 %v79
    %v109 = vunpack.c.h.b16 %v79
    %v110 = vunpack.c.l.b16 %v80
    %v111 = vunpack.c.h.b16 %v80
    %v112 = vunpack.c.l.b16 %v81
    %v113 = vunpack.c.h.b16 %v81
    %v114 = vunpack.c.l.b16 %v82
    %v115 = vunpack.c.h.b16 %v82
    %v116 = vunpack.c.l.b16 %v83
    %v117 = vunpack.c.h.b16 %v83
    %v118 = vpack.c.b16 %v106, %v102
    %v119 = vpack.c.b16 %v107, %v103
    %v120 = vpack.c.b16 %v108, %v104
    %v121 = vpack.c.b16 %v109, %v105
    %v122 = vpack.c.b16 %v114, %v110
    %v123 = vpack.c.b16 %v115, %v111
    %v124 = vpack.c.b16 %v116, %v112
    %v125 = vpack.c.b16 %v117, %v113
    %vm134 = vcmask 261120
    %v136 = vsel %vm134, %v75, 0
    %138 = vmatpush.bf16.msra.mxu0 0
    %139 = vmatpush.bf16.msra.mxu0 0
    %140 = vmatpush.bf16.msra.mxu0 0
    %141 = vmatpush.bf16.msra.mxu0 0
    %142 = vmatpush.bf16.msra.mxu0 0
    %143 = vmatpush.bf16.msra.mxu0 0
    %144 = vmatpush.bf16.msra.mxu0 %v122
    %145 = vmatpush.bf16.msra.mxu0 %v118
    %146 = vmatmul.bf16.gmra.mxu0 %v136
    %v147 = vpop.f32.mrf.mxu0
    %v148 = vadd.f32 %v86, %v147
    %v149 = vpop.f32.mrf.mxu0
    %150 = vdwg.mxu0
    %151 = vmatpush.bf16.msra.mxu0 0
    %152 = vmatpush.bf16.msra.mxu0 0
    %153 = vmatpush.bf16.msra.mxu0 0
    %154 = vmatpush.bf16.msra.mxu0 0
    %155 = vmatpush.bf16.msra.mxu0 0
    %156 = vmatpush.bf16.msra.mxu0 0
    %157 = vmatpush.bf16.msra.mxu0 %v123
    %158 = vmatpush.bf16.msra.mxu0 %v119
    %159 = vmatmul.bf16.gmra.mxu0 %v136
    %v160 = vpop.f32.mrf.mxu0
    %v161 = vadd.f32 %v87, %v160
    %v162 = vpop.f32.mrf.mxu0
    %163 = vdwg.mxu0
    %164 = vmatpush.bf16.msra.mxu0 0
    %165 = vmatpush.bf16.msra.mxu0 0
    %166 = vmatpush.bf16.msra.mxu0 0
    %167 = vmatpush.bf16.msra.mxu0 0
    %168 = vmatpush.bf16.msra.mxu0 0
    %169 = vmatpush.bf16.msra.mxu0 0
    %170 = vmatpush.bf16.msra.mxu0 %v124
    %171 = vmatpush.bf16.msra.mxu0 %v120
    %172 = vmatmul.bf16.gmra.mxu0 %v136
    %v173 = vpop.f32.mrf.mxu0
    %v174 = vadd.f32 %v88, %v173
    %v175 = vpop.f32.mrf.mxu0
    %176 = vdwg.mxu0
    %177 = vmatpush.bf16.msra.mxu0 0
    %178 = vmatpush.bf16.msra.mxu0 0
    %179 = vmatpush.bf16.msra.mxu0 0
    %180 = vmatpush.bf16.msra.mxu0 0
    %181 = vmatpush.bf16.msra.mxu0 0
    %182 = vmatpush.bf16.msra.mxu0 0
    %183 = vmatpush.bf16.msra.mxu0 %v125
    %184 = vmatpush.bf16.msra.mxu0 %v121
    %185 = vmatmul.bf16.gmra.mxu0 %v136
    %v186 = vpop.f32.mrf.mxu0
    %v187 = vadd.f32 %v89, %v186
    %v188 = vpop.f32.mrf.mxu0
    %189 = vdwg.mxu0
    %v190 = vmax.f32 %v148, 0.0
    %v191 = vmax.f32 %v161, 0.0
    %v192 = vmax.f32 %v174, 0.0
    %v193 = vmax.f32 %v187, 0.0
    %v194 = vpack.c.bf16 %v190, %v190
    %v195 = vpack.c.bf16 %v191, %v191
    %v196 = vpack.c.bf16 %v192, %v192
    %v197 = vpack.c.bf16 %v193, %v193
    %v198 = vld [vmem:[#allocation5] sm:$0xff]
    %v199 = vld [vmem:[#allocation5 + $0x8] sm:$0xff]
    %v200 = vld [vmem:[#allocation5 + $0x10] sm:$0xff]
    %v201 = vld [vmem:[#allocation5 + $0x18] sm:$0xff]
    %v202 = vld [vmem:[#allocation5 + $0x20] sm:$0xff]
    %v203 = vld [vmem:[#allocation5 + $0x28] sm:$0xff]
    %v204 = vld [vmem:[#allocation5 + $0x30] sm:$0xff]
    %v205 = vld [vmem:[#allocation5 + $0x38] sm:$0xff]
    %v206 = vld [vmem:[#allocation5 + $0x40] sm:$0xff]
    %v207 = vld [vmem:[#allocation5 + $0x48] sm:$0xff]
    %v208 = vld [vmem:[#allocation5 + $0x50] sm:$0xff]
    %v209 = vld [vmem:[#allocation5 + $0x58] sm:$0xff]
    %v210 = vld [vmem:[#allocation5 + $0x60] sm:$0xff]
    %v211 = vld [vmem:[#allocation5 + $0x68] sm:$0xff]
    %v212 = vld [vmem:[#allocation5 + $0x70] sm:$0xff]
    %v213 = vld [vmem:[#allocation5 + $0x78] sm:$0xff]
    %v214 = vld [vmem:[#allocation5 + $0x80] sm:$0xff]
    %v215 = vld [vmem:[#allocation5 + $0x88] sm:$0xff]
    %v216 = vld [vmem:[#allocation5 + $0x90] sm:$0xff]
    %v217 = vld [vmem:[#allocation5 + $0x98] sm:$0xff]
    %v218 = vld [vmem:[#allocation5 + $0xa0] sm:$0xff]
    %v219 = vld [vmem:[#allocation5 + $0xa8] sm:$0xff]
    %v220 = vld [vmem:[#allocation5 + $0xb0] sm:$0xff]
    %v221 = vld [vmem:[#allocation5 + $0xb8] sm:$0xff]
    %v222 = vld [vmem:[#allocation5 + $0xc0] sm:$0xff]
    %v223 = vld [vmem:[#allocation5 + $0xc8] sm:$0xff]
    %v224 = vld [vmem:[#allocation5 + $0xd0] sm:$0xff]
    %v225 = vld [vmem:[#allocation5 + $0xd8] sm:$0xff]
    %v226 = vld [vmem:[#allocation5 + $0xe0] sm:$0xff]
    %v227 = vld [vmem:[#allocation5 + $0xe8] sm:$0xff]
    %v228 = vld [vmem:[#allocation5 + $0xf0] sm:$0xff]
    %v229 = vld [vmem:[#allocation5 + $0xf8] sm:$0xff]
    %v230 = vld [vmem:[#allocation5 + $0x100] sm:$0xff]
    %v231 = vld [vmem:[#allocation5 + $0x108] sm:$0xff]
    %v232 = vld [vmem:[#allocation5 + $0x110] sm:$0xff]
    %v233 = vld [vmem:[#allocation5 + $0x118] sm:$0xff]
    %v234 = vld [vmem:[#allocation5 + $0x120] sm:$0xff]
    %v235 = vld [vmem:[#allocation5 + $0x128] sm:$0xff]
    %v236 = vld [vmem:[#allocation5 + $0x130] sm:$0xff]
    %v237 = vld [vmem:[#allocation5 + $0x138] sm:$0xff]
    %v238 = vld [vmem:[#allocation5 + $0x140] sm:$0xff]
    %v239 = vld [vmem:[#allocation5 + $0x148] sm:$0xff]
    %v240 = vld [vmem:[#allocation5 + $0x150] sm:$0xff]
    %v241 = vld [vmem:[#allocation5 + $0x158] sm:$0xff]
    %v242 = vld [vmem:[#allocation5 + $0x160] sm:$0xff]
    %v243 = vld [vmem:[#allocation5 + $0x168] sm:$0xff]
    %v244 = vld [vmem:[#allocation5 + $0x170] sm:$0xff]
    %v245 = vld [vmem:[#allocation5 + $0x178] sm:$0xff]
    %v246 = vld [vmem:[#allocation5 + $0x180] sm:$0xff]
    %v247 = vld [vmem:[#allocation5 + $0x188] sm:$0xff]
    %v248 = vld [vmem:[#allocation5 + $0x190] sm:$0xff]
    %v249 = vld [vmem:[#allocation5 + $0x198] sm:$0xff]
    %v250 = vld [vmem:[#allocation5 + $0x1a0] sm:$0xff]
    %v251 = vld [vmem:[#allocation5 + $0x1a8] sm:$0xff]
    %v252 = vld [vmem:[#allocation5 + $0x1b0] sm:$0xff]
    %v253 = vld [vmem:[#allocation5 + $0x1b8] sm:$0xff]
    %v254 = vld [vmem:[#allocation5 + $0x1c0] sm:$0xff]
    %v255 = vld [vmem:[#allocation5 + $0x1c8] sm:$0xff]
    %v256 = vld [vmem:[#allocation5 + $0x1d0] sm:$0xff]
    %v257 = vld [vmem:[#allocation5 + $0x1d8] sm:$0xff]
    %v258 = vld [vmem:[#allocation5 + $0x1e0] sm:$0xff]
    %v259 = vld [vmem:[#allocation5 + $0x1e8] sm:$0xff]
    %v260 = vld [vmem:[#allocation5 + $0x1f0] sm:$0xff]
    %v261 = vld [vmem:[#allocation5 + $0x1f8] sm:$0xff]
    %v262 = vld [vmem:[%s4] sm:$0x3]
    %v264 = vperm.slane %v262, 0
    %v265 = vperm.slane %v262, 1
    %v332 = vunpack.c.l.b16 %v198
    %v333 = vunpack.c.h.b16 %v198
    %v334 = vunpack.c.l.b16 %v199
    %v335 = vunpack.c.h.b16 %v199
    %v336 = vunpack.c.l.b16 %v200
    %v337 = vunpack.c.h.b16 %v200
    %v338 = vunpack.c.l.b16 %v201
    %v339 = vunpack.c.h.b16 %v201
    %v340 = vunpack.c.l.b16 %v202
    %v341 = vunpack.c.h.b16 %v202
    %v342 = vunpack.c.l.b16 %v203
    %v343 = vunpack.c.h.b16 %v203
    %v344 = vunpack.c.l.b16 %v204
    %v345 = vunpack.c.h.b16 %v204
    %v346 = vunpack.c.l.b16 %v205
    %v347 = vunpack.c.h.b16 %v205
    %v348 = vunpack.c.l.b16 %v206
    %v349 = vunpack.c.h.b16 %v206
    %v350 = vunpack.c.l.b16 %v207
    %v351 = vunpack.c.h.b16 %v207
    %v352 = vunpack.c.l.b16 %v208
    %v353 = vunpack.c.h.b16 %v208
    %v354 = vunpack.c.l.b16 %v209
    %v355 = vunpack.c.h.b16 %v209
    %v356 = vunpack.c.l.b16 %v210
    %v357 = vunpack.c.h.b16 %v210
    %v358 = vunpack.c.l.b16 %v211
    %v359 = vunpack.c.h.b16 %v211
    %v360 = vunpack.c.l.b16 %v212
    %v361 = vunpack.c.h.b16 %v212
    %v362 = vunpack.c.l.b16 %v213
    %v363 = vunpack.c.h.b16 %v213
    %v364 = vunpack.c.l.b16 %v214
    %v365 = vunpack.c.h.b16 %v214
    %v366 = vunpack.c.l.b16 %v215
    %v367 = vunpack.c.h.b16 %v215
    %v368 = vunpack.c.l.b16 %v216
    %v369 = vunpack.c.h.b16 %v216
    %v370 = vunpack.c.l.b16 %v217
    %v371 = vunpack.c.h.b16 %v217
    %v372 = vunpack.c.l.b16 %v218
    %v373 = vunpack.c.h.b16 %v218
    %v374 = vunpack.c.l.b16 %v219
    %v375 = vunpack.c.h.b16 %v219
    %v376 = vunpack.c.l.b16 %v220
    %v377 = vunpack.c.h.b16 %v220
    %v378 = vunpack.c.l.b16 %v221
    %v379 = vunpack.c.h.b16 %v221
    %v380 = vunpack.c.l.b16 %v222
    %v381 = vunpack.c.h.b16 %v222
    %v382 = vunpack.c.l.b16 %v223
    %v383 = vunpack.c.h.b16 %v223
    %v384 = vunpack.c.l.b16 %v224
    %v385 = vunpack.c.h.b16 %v224
    %v386 = vunpack.c.l.b16 %v225
    %v387 = vunpack.c.h.b16 %v225
    %v388 = vunpack.c.l.b16 %v226
    %v389 = vunpack.c.h.b16 %v226
    %v390 = vunpack.c.l.b16 %v227
    %v391 = vunpack.c.h.b16 %v227
    %v392 = vunpack.c.l.b16 %v228
    %v393 = vunpack.c.h.b16 %v228
    %v394 = vunpack.c.l.b16 %v229
    %v395 = vunpack.c.h.b16 %v229
    %v396 = vunpack.c.l.b16 %v230
    %v397 = vunpack.c.h.b16 %v230
    %v398 = vunpack.c.l.b16 %v231
    %v399 = vunpack.c.h.b16 %v231
    %v400 = vunpack.c.l.b16 %v232
    %v401 = vunpack.c.h.b16 %v232
    %v402 = vunpack.c.l.b16 %v233
    %v403 = vunpack.c.h.b16 %v233
    %v404 = vunpack.c.l.b16 %v234
    %v405 = vunpack.c.h.b16 %v234
    %v406 = vunpack.c.l.b16 %v235
    %v407 = vunpack.c.h.b16 %v235
    %v408 = vunpack.c.l.b16 %v236
    %v409 = vunpack.c.h.b16 %v236
    %v410 = vunpack.c.l.b16 %v237
    %v411 = vunpack.c.h.b16 %v237
    %v412 = vunpack.c.l.b16 %v238
    %v413 = vunpack.c.h.b16 %v238
    %v414 = vunpack.c.l.b16 %v239
    %v415 = vunpack.c.h.b16 %v239
    %v416 = vunpack.c.l.b16 %v240
    %v417 = vunpack.c.h.b16 %v240
    %v418 = vunpack.c.l.b16 %v241
    %v419 = vunpack.c.h.b16 %v241
    %v420 = vunpack.c.l.b16 %v242
    %v421 = vunpack.c.h.b16 %v242
    %v422 = vunpack.c.l.b16 %v243
    %v423 = vunpack.c.h.b16 %v243
    %v424 = vunpack.c.l.b16 %v244
    %v425 = vunpack.c.h.b16 %v244
    %v426 = vunpack.c.l.b16 %v245
    %v427 = vunpack.c.h.b16 %v245
    %v428 = vunpack.c.l.b16 %v246
    %v429 = vunpack.c.h.b16 %v246
    %v430 = vunpack.c.l.b16 %v247
    %v431 = vunpack.c.h.b16 %v247
    %v432 = vunpack.c.l.b16 %v248
    %v433 = vunpack.c.h.b16 %v248
    %v434 = vunpack.c.l.b16 %v249
    %v435 = vunpack.c.h.b16 %v249
    %v436 = vunpack.c.l.b16 %v250
    %v437 = vunpack.c.h.b16 %v250
    %v438 = vunpack.c.l.b16 %v251
    %v439 = vunpack.c.h.b16 %v251
    %v440 = vunpack.c.l.b16 %v252
    %v441 = vunpack.c.h.b16 %v252
    %v442 = vunpack.c.l.b16 %v253
    %v443 = vunpack.c.h.b16 %v253
    %v444 = vunpack.c.l.b16 %v254
    %v445 = vunpack.c.h.b16 %v254
    %v446 = vunpack.c.l.b16 %v255
    %v447 = vunpack.c.h.b16 %v255
    %v448 = vunpack.c.l.b16 %v256
    %v449 = vunpack.c.h.b16 %v256
    %v450 = vunpack.c.l.b16 %v257
    %v451 = vunpack.c.h.b16 %v257
    %v452 = vunpack.c.l.b16 %v258
    %v453 = vunpack.c.h.b16 %v258
    %v454 = vunpack.c.l.b16 %v259
    %v455 = vunpack.c.h.b16 %v259
    %v456 = vunpack.c.l.b16 %v260
    %v457 = vunpack.c.h.b16 %v260
    %v458 = vunpack.c.l.b16 %v261
    %v459 = vunpack.c.h.b16 %v261
    %v460 = vpack.c.b16 %v334, %v332
    %v461 = vpack.c.b16 %v335, %v333
    %v462 = vpack.c.b16 %v338, %v336
    %v463 = vpack.c.b16 %v339, %v337
    %v464 = vpack.c.b16 %v342, %v340
    %v465 = vpack.c.b16 %v343, %v341
    %v466 = vpack.c.b16 %v346, %v344
    %v467 = vpack.c.b16 %v347, %v345
    %v468 = vpack.c.b16 %v350, %v348
    %v469 = vpack.c.b16 %v351, %v349
    %v470 = vpack.c.b16 %v354, %v352
    %v471 = vpack.c.b16 %v355, %v353
    %v472 = vpack.c.b16 %v358, %v356
    %v473 = vpack.c.b16 %v359, %v357
    %v474 = vpack.c.b16 %v362, %v360
    %v475 = vpack.c.b16 %v363, %v361
    %v476 = vpack.c.b16 %v366, %v364
    %v477 = vpack.c.b16 %v367, %v365
    %v478 = vpack.c.b16 %v370, %v368
    %v479 = vpack.c.b16 %v371, %v369
    %v480 = vpack.c.b16 %v374, %v372
    %v481 = vpack.c.b16 %v375, %v373
    %v482 = vpack.c.b16 %v378, %v376
    %v483 = vpack.c.b16 %v379, %v377
    %v484 = vpack.c.b16 %v382, %v380
    %v485 = vpack.c.b16 %v383, %v381
    %v486 = vpack.c.b16 %v386, %v384
    %v487 = vpack.c.b16 %v387, %v385
    %v488 = vpack.c.b16 %v390, %v388
    %v489 = vpack.c.b16 %v391, %v389
    %v490 = vpack.c.b16 %v394, %v392
    %v491 = vpack.c.b16 %v395, %v393
    %v492 = vpack.c.b16 %v398, %v396
    %v493 = vpack.c.b16 %v399, %v397
    %v494 = vpack.c.b16 %v402, %v400
    %v495 = vpack.c.b16 %v403, %v401
    %v496 = vpack.c.b16 %v406, %v404
    %v497 = vpack.c.b16 %v407, %v405
    %v498 = vpack.c.b16 %v410, %v408
    %v499 = vpack.c.b16 %v411, %v409
    %v500 = vpack.c.b16 %v414, %v412
    %v501 = vpack.c.b16 %v415, %v413
    %v502 = vpack.c.b16 %v418, %v416
    %v503 = vpack.c.b16 %v419, %v417
    %v504 = vpack.c.b16 %v422, %v420
    %v505 = vpack.c.b16 %v423, %v421
    %v506 = vpack.c.b16 %v426, %v424
    %v507 = vpack.c.b16 %v427, %v425
    %v508 = vpack.c.b16 %v430, %v428
    %v509 = vpack.c.b16 %v431, %v429
    %v510 = vpack.c.b16 %v434, %v432
    %v511 = vpack.c.b16 %v435, %v433
    %v512 = vpack.c.b16 %v438, %v436
    %v513 = vpack.c.b16 %v439, %v437
    %v514 = vpack.c.b16 %v442, %v440
    %v515 = vpack.c.b16 %v443, %v441
    %v516 = vpack.c.b16 %v446, %v444
    %v517 = vpack.c.b16 %v447, %v445
    %v518 = vpack.c.b16 %v450, %v448
    %v519 = vpack.c.b16 %v451, %v449
    %v520 = vpack.c.b16 %v454, %v452
    %v521 = vpack.c.b16 %v455, %v453
    %v522 = vpack.c.b16 %v458, %v456
    %v523 = vpack.c.b16 %v459, %v457
    %588 = vmatpush.bf16.msra.mxu0 %v474
    %589 = vmatpush.bf16.msra.mxu0 %v472
    %590 = vmatpush.bf16.msra.mxu0 %v470
    %591 = vmatpush.bf16.msra.mxu0 %v468
    %592 = vmatpush.bf16.msra.mxu0 %v466
    %593 = vmatpush.bf16.msra.mxu0 %v464
    %594 = vmatpush.bf16.msra.mxu0 %v462
    %595 = vmatpush.bf16.msra.mxu0 %v460
    %596 = vmatmul.bf16.gmra.mxu0 %v194
    %v597 = vpop.f32.mrf.mxu0
    %v598 = vadd.f32 %v264, %v597
    %v599 = vpop.f32.mrf.mxu0
    %600 = vdwg.mxu0
    %601 = vmatpush.bf16.msra.mxu0 %v490
    %602 = vmatpush.bf16.msra.mxu0 %v488
    %603 = vmatpush.bf16.msra.mxu0 %v486
    %604 = vmatpush.bf16.msra.mxu0 %v484
    %605 = vmatpush.bf16.msra.mxu0 %v482
    %606 = vmatpush.bf16.msra.mxu0 %v480
    %607 = vmatpush.bf16.msra.mxu0 %v478
    %608 = vmatpush.bf16.msra.mxu0 %v476
    %609 = vmatmul.bf16.gmra.mxu0 %v195
    %v610 = vpop.f32.mrf.mxu0
    %v611 = vadd.f32 %v598, %v610
    %v612 = vpop.f32.mrf.mxu0
    %613 = vdwg.mxu0
    %614 = vmatpush.bf16.msra.mxu0 %v506
    %615 = vmatpush.bf16.msra.mxu0 %v504
    %616 = vmatpush.bf16.msra.mxu0 %v502
    %617 = vmatpush.bf16.msra.mxu0 %v500
    %618 = vmatpush.bf16.msra.mxu0 %v498
    %619 = vmatpush.bf16.msra.mxu0 %v496
    %620 = vmatpush.bf16.msra.mxu0 %v494
    %621 = vmatpush.bf16.msra.mxu0 %v492
    %622 = vmatmul.bf16.gmra.mxu0 %v196
    %v623 = vpop.f32.mrf.mxu0
    %v624 = vadd.f32 %v611, %v623
    %v625 = vpop.f32.mrf.mxu0
    %626 = vdwg.mxu0
    %627 = vmatpush.bf16.msra.mxu0 %v522
    %628 = vmatpush.bf16.msra.mxu0 %v520
    %629 = vmatpush.bf16.msra.mxu0 %v518
    %630 = vmatpush.bf16.msra.mxu0 %v516
    %631 = vmatpush.bf16.msra.mxu0 %v514
    %632 = vmatpush.bf16.msra.mxu0 %v512
    %633 = vmatpush.bf16.msra.mxu0 %v510
    %634 = vmatpush.bf16.msra.mxu0 %v508
    %635 = vmatmul.bf16.gmra.mxu0 %v197
    %v636 = vpop.f32.mrf.mxu0
    %v637 = vadd.f32 %v624, %v636
    %v638 = vpop.f32.mrf.mxu0
    %639 = vdwg.mxu0
    %640 = vmatpush.bf16.msra.mxu0 %v475
    %641 = vmatpush.bf16.msra.mxu0 %v473
    %642 = vmatpush.bf16.msra.mxu0 %v471
    %643 = vmatpush.bf16.msra.mxu0 %v469
    %644 = vmatpush.bf16.msra.mxu0 %v467
    %645 = vmatpush.bf16.msra.mxu0 %v465
    %646 = vmatpush.bf16.msra.mxu0 %v463
    %647 = vmatpush.bf16.msra.mxu0 %v461
    %648 = vmatmul.bf16.gmra.mxu0 %v194
    %v649 = vpop.f32.mrf.mxu0
    %v650 = vadd.f32 %v265, %v649
    %v651 = vpop.f32.mrf.mxu0
    %652 = vdwg.mxu0
    %653 = vmatpush.bf16.msra.mxu0 %v491
    %654 = vmatpush.bf16.msra.mxu0 %v489
    %655 = vmatpush.bf16.msra.mxu0 %v487
    %656 = vmatpush.bf16.msra.mxu0 %v485
    %657 = vmatpush.bf16.msra.mxu0 %v483
    %658 = vmatpush.bf16.msra.mxu0 %v481
    %659 = vmatpush.bf16.msra.mxu0 %v479
    %660 = vmatpush.bf16.msra.mxu0 %v477
    %661 = vmatmul.bf16.gmra.mxu0 %v195
    %v662 = vpop.f32.mrf.mxu0
    %v663 = vadd.f32 %v650, %v662
    %v664 = vpop.f32.mrf.mxu0
    %665 = vdwg.mxu0
    %666 = vmatpush.bf16.msra.mxu0 %v507
    %667 = vmatpush.bf16.msra.mxu0 %v505
    %668 = vmatpush.bf16.msra.mxu0 %v503
    %669 = vmatpush.bf16.msra.mxu0 %v501
    %670 = vmatpush.bf16.msra.mxu0 %v499
    %671 = vmatpush.bf16.msra.mxu0 %v497
    %672 = vmatpush.bf16.msra.mxu0 %v495
    %673 = vmatpush.bf16.msra.mxu0 %v493
    %674 = vmatmul.bf16.gmra.mxu0 %v196
    %v675 = vpop.f32.mrf.mxu0
    %v676 = vadd.f32 %v663, %v675
    %v677 = vpop.f32.mrf.mxu0
    %678 = vdwg.mxu0
    %679 = vmatpush.bf16.msra.mxu0 %v523
    %680 = vmatpush.bf16.msra.mxu0 %v521
    %681 = vmatpush.bf16.msra.mxu0 %v519
    %682 = vmatpush.bf16.msra.mxu0 %v517
    %683 = vmatpush.bf16.msra.mxu0 %v515
    %684 = vmatpush.bf16.msra.mxu0 %v513
    %685 = vmatpush.bf16.msra.mxu0 %v511
    %686 = vmatpush.bf16.msra.mxu0 %v509
    %687 = vmatmul.bf16.gmra.mxu0 %v197
    %v688 = vpop.f32.mrf.mxu0
    %v689 = vadd.f32 %v676, %v688
    %v690 = vpop.f32.mrf.mxu0
    %691 = vdwg.mxu0
    %v692 = vmax.f32 %v637, 0.0
    %v693 = vmax.f32 %v689, 0.0
    %v694 = vpack.c.bf16 %v692, %v692
    %v695 = vpack.c.bf16 %v693, %v693
    %v696 = vld [vmem:[#allocation7] sm:$0xf]
    %v697 = vld [vmem:[#allocation7 + $0x4] sm:$0xf]
    %v698 = vld [vmem:[#allocation7 + $0x8] sm:$0xf]
    %v699 = vld [vmem:[#allocation7 + $0xc] sm:$0xf]
    %v700 = vld [vmem:[#allocation7 + $0x10] sm:$0xf]
    %v701 = vld [vmem:[#allocation7 + $0x14] sm:$0xf]
    %v702 = vld [vmem:[#allocation7 + $0x18] sm:$0xf]
    %v703 = vld [vmem:[#allocation7 + $0x1c] sm:$0xf]
    %v704 = vld [vmem:[#allocation7 + $0x20] sm:$0xf]
    %v705 = vld [vmem:[#allocation7 + $0x24] sm:$0xf]
    %v706 = vld [vmem:[#allocation7 + $0x28] sm:$0xf]
    %v707 = vld [vmem:[#allocation7 + $0x2c] sm:$0xf]
    %v708 = vld [vmem:[#allocation7 + $0x30] sm:$0xf]
    %v709 = vld [vmem:[#allocation7 + $0x34] sm:$0xf]
    %v710 = vld [vmem:[#allocation7 + $0x38] sm:$0xf]
    %v711 = vld [vmem:[#allocation7 + $0x3c] sm:$0xf]
    %v712 = vld [vmem:[#allocation7 + $0x40] sm:$0xf]
    %v713 = vld [vmem:[#allocation7 + $0x44] sm:$0xf]
    %v714 = vld [vmem:[#allocation7 + $0x48] sm:$0xf]
    %v715 = vld [vmem:[#allocation7 + $0x4c] sm:$0xf]
    %v716 = vld [vmem:[#allocation7 + $0x50] sm:$0xf]
    %v717 = vld [vmem:[#allocation7 + $0x54] sm:$0xf]
    %v718 = vld [vmem:[#allocation7 + $0x58] sm:$0xf]
    %v719 = vld [vmem:[#allocation7 + $0x5c] sm:$0xf]
    %v720 = vld [vmem:[#allocation7 + $0x60] sm:$0xf]
    %v721 = vld [vmem:[#allocation7 + $0x64] sm:$0xf]
    %v722 = vld [vmem:[#allocation7 + $0x68] sm:$0xf]
    %v723 = vld [vmem:[#allocation7 + $0x6c] sm:$0xf]
    %v724 = vld [vmem:[#allocation7 + $0x70] sm:$0xf]
    %v725 = vld [vmem:[#allocation7 + $0x74] sm:$0xf]
    %v726 = vld [vmem:[#allocation7 + $0x78] sm:$0xf]
    %v727 = vld [vmem:[#allocation7 + $0x7c] sm:$0xf]
    %v728 = vld [vmem:[%s6] sm:$0x1]
    %v730 = vperm.slane %v728, 0
    %v764 = vunpack.c.l.b16 %v696
    %v765 = vunpack.c.l.b16 %v697
    %v766 = vunpack.c.l.b16 %v698
    %v767 = vunpack.c.l.b16 %v699
    %v768 = vunpack.c.l.b16 %v700
    %v769 = vunpack.c.l.b16 %v701
    %v770 = vunpack.c.l.b16 %v702
    %v771 = vunpack.c.l.b16 %v703
    %v772 = vunpack.c.l.b16 %v704
    %v773 = vunpack.c.l.b16 %v705
    %v774 = vunpack.c.l.b16 %v706
    %v775 = vunpack.c.l.b16 %v707
    %v776 = vunpack.c.l.b16 %v708
    %v777 = vunpack.c.l.b16 %v709
    %v778 = vunpack.c.l.b16 %v710
    %v779 = vunpack.c.l.b16 %v711
    %v780 = vunpack.c.l.b16 %v712
    %v781 = vunpack.c.l.b16 %v713
    %v782 = vunpack.c.l.b16 %v714
    %v783 = vunpack.c.l.b16 %v715
    %v784 = vunpack.c.l.b16 %v716
    %v785 = vunpack.c.l.b16 %v717
    %v786 = vunpack.c.l.b16 %v718
    %v787 = vunpack.c.l.b16 %v719
    %v788 = vunpack.c.l.b16 %v720
    %v789 = vunpack.c.l.b16 %v721
    %v790 = vunpack.c.l.b16 %v722
    %v791 = vunpack.c.l.b16 %v723
    %v792 = vunpack.c.l.b16 %v724
    %v793 = vunpack.c.l.b16 %v725
    %v794 = vunpack.c.l.b16 %v726
    %v795 = vunpack.c.l.b16 %v727
    %v796 = vpack.c.b16 %v765, %v764
    %v797 = vpack.c.b16 %v767, %v766
    %v798 = vpack.c.b16 %v769, %v768
    %v799 = vpack.c.b16 %v771, %v770
    %v800 = vpack.c.b16 %v773, %v772
    %v801 = vpack.c.b16 %v775, %v774
    %v802 = vpack.c.b16 %v777, %v776
    %v803 = vpack.c.b16 %v779, %v778
    %v804 = vpack.c.b16 %v781, %v780
    %v805 = vpack.c.b16 %v783, %v782
    %v806 = vpack.c.b16 %v785, %v784
    %v807 = vpack.c.b16 %v787, %v786
    %v808 = vpack.c.b16 %v789, %v788
    %v809 = vpack.c.b16 %v791, %v790
    %v810 = vpack.c.b16 %v793, %v792
    %v811 = vpack.c.b16 %v795, %v794
    %828 = vmatpush.bf16.msra.mxu0 %v803
    %829 = vmatpush.bf16.msra.mxu0 %v802
    %830 = vmatpush.bf16.msra.mxu0 %v801
    %831 = vmatpush.bf16.msra.mxu0 %v800
    %832 = vmatpush.bf16.msra.mxu0 %v799
    %833 = vmatpush.bf16.msra.mxu0 %v798
    %834 = vmatpush.bf16.msra.mxu0 %v797
    %835 = vmatpush.bf16.msra.mxu0 %v796
    %836 = vmatmul.bf16.gmra.mxu0 %v694
    %v837 = vpop.f32.mrf.mxu0
    %v838 = vadd.f32 %v730, %v837
    %v839 = vpop.f32.mrf.mxu0
    %840 = vdwg.mxu0
    %841 = vmatpush.bf16.msra.mxu0 %v811
    %842 = vmatpush.bf16.msra.mxu0 %v810
    %843 = vmatpush.bf16.msra.mxu0 %v809
    %844 = vmatpush.bf16.msra.mxu0 %v808
    %845 = vmatpush.bf16.msra.mxu0 %v807
    %846 = vmatpush.bf16.msra.mxu0 %v806
    %847 = vmatpush.bf16.msra.mxu0 %v805
    %848 = vmatpush.bf16.msra.mxu0 %v804
    %849 = vmatmul.bf16.gmra.mxu0 %v695
    %v850 = vpop.f32.mrf.mxu0
    %v851 = vadd.f32 %v838, %v850
    %v852 = vpop.f32.mrf.mxu0
    %853 = vdwg.mxu0
    %854 = vmax.xlane.f32.xlu0 %v851
    %v855 = vpop.xlane.xlu0 %854
    %v856 = vsub.f32 %v851, %v855
    %v857 = vmul.f32 %v856, 1.442695
    %v858 = vpow.pop %v857
    %859 = vadd.xlane.f32.xlu0 %v858
    %v860 = vpop.xlane.xlu0 %859
    %v861 = vrcp.pop %v860
    %v862 = vmul.f32 %v860, %v861
    %v863 = vsub.f32 1.0, %v862
    %v864 = vmul.f32 %v861, %v863
    %v865 = vadd.f32 %v861, %v864
    %vm866 = vweird.f32 %v860
    %vm867 = vweird.f32 %v861
    %vm868 = vmor %vm866, %vm867
    %v869 = vsel %vm868, %v861, %v865
    %v870 = vand.u32 2147483647, %v860
    %vm871 = vcmp.eq.f32.partialorder %v870, 8.507059e+37
    %v872 = vand.u32 %v860, 2147483648
    %v873 = vor.u32 1.1754944e-38, %v872
    %v874 = vsel %vm871, %v873, %v869
    %v875 = vmul.f32 %v858, %v874
    %876 = vst [vmem:[#allocation8] sm:$0xff] %v875
    // Predicated region
    $region42: #{policy_network_forward.1} parent=1 // pred_check
      _
    $region43: #{policy_network_forward.1} parent=1 // pred_check_branch
      %878 = sbr.rel (0) target = $region45
    $region44: #{policy_network_forward.1} parent=1 // pred_region
      %880 = vsyncadd [#allocation4], 0
      %s882 = sshll.u32 [#allocation8], 4
      %s883 = int_to_ptr.vmem [resolvable:$true] %s882
      %s884 = sshll.u32 %s7, 4
      %s885 = int_to_ptr.hbm [resolvable:$true] %s884
      %887 = dma.vmem_to_hbm [thread:$0]  %s883, 128, %s885, [#allocation4]
    $region45: #{policy_network_forward.1} parent=1 // pred_fallthru
      _
    // Predicated region
    $region46: #{policy_network_forward.1} parent=1 // pred_check
      _
    $region47: #{policy_network_forward.1} parent=1 // pred_check_branch
      %889 = sbr.rel (0) target = $region49
    $region48: #{policy_network_forward.1} parent=1 // pred_region
      %891 = dma.done [#allocation4], 128
    $region49: #{policy_network_forward.1} parent=1 // pred_fallthru
      _
    %892 = vsyncpa [#allocation3], 1
    %893 = vsyncpa [#allocation6], 1
    %894 = vsyncpa [#allocation4], 1

</llo_original>
